<compile_context>
chip_gen: v7x
topology: tpu7x:2x2x1
jax: 0.10.0
libtpu: 0.0.40
codegen_flags: <defaults>
</compile_context>

<pallas_src>
import jax
import jax.numpy as jnp
from jax.experimental import pallas as pl
from jax.experimental.pallas import tpu as pltpu

H1, H2 = 512, 256


def _discriminator_kernel(x_ref, w1_ref, b1_ref, w2_ref, b2_ref,
                          w3_ref, b3_ref, o_ref):
    # bf16 MXU operands, f32 accumulation, f32 VPU elementwise.
    x = x_ref[...].astype(jnp.bfloat16)

    # Linear(input_dim + condition_dim, 512): single fused dot (concat done in
    # the wrapper), then LeakyReLU(0.2) as mul+max (2 VALU ops/elem).
    h1 = jnp.dot(x, w1_ref[...], preferred_element_type=jnp.float32) + b1_ref[...]
    h1 = jnp.maximum(h1, 0.2 * h1)

    # Linear(512, 256) + LeakyReLU(0.2)
    h2 = jnp.dot(h1.astype(jnp.bfloat16), w2_ref[...],
                 preferred_element_type=jnp.float32) + b2_ref[...]
    h2 = jnp.maximum(h2, 0.2 * h2)

    # Linear(256, 1): N=1 head -> VPU multiply + lane reduction (no lane-sparse
    # MXU dot). w3 stored (1, 256) f32.
    h3 = jnp.sum(h2 * w3_ref[...], axis=-1, keepdims=True) + b3_ref[...]

    # Sigmoid: exp + exact reciprocal, both on the EUP (off the VALU slot).
    o_ref[...] = pl.reciprocal(1.0 + jnp.exp(-h3), approx=False).astype(o_ref.dtype)


def _round_up(n, m):
    return ((n + m - 1) // m) * m


def _choose_tile(batch, tile_b):
    """Batch tile: multiple of 8, targets `tile_b`, minimal padding for small
    batches, and >=2 grid steps when there is enough work (v7x megacore)."""
    b8 = _round_up(max(batch, 1), 8)
    tb = max(_round_up(tile_b, 8), 8)
    if b8 >= 512:  # enough rows: force at least 2 grid steps for 2-TC chips
        tb = min(tb, _round_up(pl.cdiv(b8, 2), 8))
    return min(tb, b8)


def discriminator_forward(data, conditions, params, *, tile_b=1024):
    """data: (B, input_dim), conditions: (B, condition_dim) -> (B, 1) float32."""
    w1, b1, w2, b2, w3, b3 = params
    B = data.shape[0]

    # Fused concat (one cheap XLA op; ~96 B/row) feeding a single layer-1 dot.
    x = jnp.concatenate([data.astype(jnp.float32),
                         conditions.astype(jnp.float32)], axis=1)
    in0 = x.shape[1]

    tb = _choose_tile(B, tile_b)
    b_pad = _round_up(B, tb)
    if b_pad != B:
        x = jnp.pad(x, ((0, b_pad - B), (0, 0)))
    num_tiles = b_pad // tb

    resident = lambda shape: pl.BlockSpec(shape, lambda i: (0, 0))  # VMEM-resident

    out = pl.pallas_call(
        _discriminator_kernel,
        out_shape=jax.ShapeDtypeStruct((b_pad, 1), jnp.float32),
        grid=(num_tiles,),
        in_specs=[
            pl.BlockSpec((tb, in0), lambda i: (i, 0)),
            resident(w1.shape), resident(b1.shape),
            resident(w2.shape), resident(b2.shape),
            resident(w3.shape), resident(b3.shape),
        ],
        out_specs=pl.BlockSpec((tb, 1), lambda i: (i, 0)),
        compiler_params=pltpu.CompilerParams(
            dimension_semantics=("parallel",)),
    )(x, w1, b1, w2, b2, w3, b3)
    return out[:B]


def init_params(key, input_dim, condition_dim):
    """nn.Linear-style init. Matmul weights stored (in, out); W1/W2 cast to
    bf16 for the MXU (f32 accumulation) — deliberate precision tradeoff."""
    ks = jax.random.split(key, 6)
    in0 = input_dim + condition_dim
    bound1 = 1.0 / float(in0) ** 0.5
    bound2 = 1.0 / float(H1) ** 0.5
    bound3 = 1.0 / float(H2) ** 0.5

    w1 = jax.random.uniform(ks[0], (in0, H1), jnp.float32, -bound1, bound1)
    b1 = jax.random.uniform(ks[1], (1, H1), jnp.float32, -bound1, bound1)
    w2 = jax.random.uniform(ks[2], (H1, H2), jnp.float32, -bound2, bound2)
    b2 = jax.random.uniform(ks[3], (1, H2), jnp.float32, -bound2, bound2)
    w3 = jax.random.uniform(ks[4], (1, H2), jnp.float32, -bound3, bound3)  # VPU head: f32
    b3 = jax.random.uniform(ks[5], (1, 1), jnp.float32, -bound3, bound3)

    return (w1.astype(jnp.bfloat16), b1, w2.astype(jnp.bfloat16), b2, w3, b3)


if __name__ == "__main__":
    key = jax.random.PRNGKey(0)
    k_data, k_cond, k_param = jax.random.split(key, 3)

    batch = 8
    input_dim = 16
    condition_dim = 8

    data = jax.random.normal(k_data, (batch, input_dim), jnp.float32)
    conditions = jax.random.normal(k_cond, (batch, condition_dim), jnp.float32)
    params = init_params(k_param, input_dim, condition_dim)

    out = jax.block_until_ready(discriminator_forward(data, conditions, params))

    # Plain f32 JAX reference (bf16 weights upcast back). Remaining error comes
    # only from bf16 MXU operands (f32 accumulation), so tolerance is modest.
    w1, b1, w2, b2, w3, b3 = params
    x = jnp.concatenate([data, conditions], axis=1)
    h = x @ w1.astype(jnp.float32) + b1
    h = jnp.where(h >= 0, h, 0.2 * h)
    h = h @ w2.astype(jnp.float32) + b2
    h = jnp.where(h >= 0, h, 0.2 * h)
    ref = jax.nn.sigmoid(h @ w3.T + b3)

    assert out.shape == (batch, 1)
    assert jnp.allclose(out, ref, atol=1e-2), "mismatch vs reference"

    print("KERNEL_OK")
</pallas_src>

<mosaic_0001>
module attributes {stable_mosaic.version = 11 : i64} {
  func.func @_discriminator_kernel(%arg0: i32, %arg1: memref<8x24xf32, #tpu.memory_space<vmem>>, %arg2: memref<24x512xbf16, #tpu.memory_space<vmem>>, %arg3: memref<1x512xf32, #tpu.memory_space<vmem>>, %arg4: memref<512x256xbf16, #tpu.memory_space<vmem>>, %arg5: memref<1x256xf32, #tpu.memory_space<vmem>>, %arg6: memref<1x256xf32, #tpu.memory_space<vmem>>, %arg7: memref<1x1xf32, #tpu.memory_space<vmem>>, %arg8: memref<8x1xf32, #tpu.memory_space<vmem>>) attributes {dimension_semantics = [#tpu.dimension_semantics<parallel>], iteration_bounds = array<i64: 1>, scalar_prefetch = 0 : i64, scratch_operands = 0 : i64, tpu.core_type = #tpu.core_type<tc>, window_params = [{transform_indices = @transform_0, window_bounds = array<i64: 8, 24>}, {pipeline_mode = #tpu.pipeline_mode<synchronous>, transform_indices = @transform_1, window_bounds = array<i64: 24, 512>}, {pipeline_mode = #tpu.pipeline_mode<synchronous>, transform_indices = @transform_2, window_bounds = array<i64: 1, 512>}, {pipeline_mode = #tpu.pipeline_mode<synchronous>, transform_indices = @transform_3, window_bounds = array<i64: 512, 256>}, {pipeline_mode = #tpu.pipeline_mode<synchronous>, transform_indices = @transform_4, window_bounds = array<i64: 1, 256>}, {pipeline_mode = #tpu.pipeline_mode<synchronous>, transform_indices = @transform_5, window_bounds = array<i64: 1, 256>}, {pipeline_mode = #tpu.pipeline_mode<synchronous>, transform_indices = @transform_6, window_bounds = array<i64: 1, 1>}, {transform_indices = @transform_7, window_bounds = array<i64: 8, 1>}]} {
    %c0 = arith.constant 0 : index
    %c0_0 = arith.constant 0 : index
    %0 = vector.load %arg1[%c0, %c0_0] : memref<8x24xf32, #tpu.memory_space<vmem>>, vector<8x24xf32>
    %1 = arith.truncf %0 : vector<8x24xf32> to vector<8x24xbf16>
    %c0_1 = arith.constant 0 : index
    %c0_2 = arith.constant 0 : index
    %2 = vector.load %arg2[%c0_1, %c0_2] : memref<24x512xbf16, #tpu.memory_space<vmem>>, vector<24x512xbf16>
    %cst = arith.constant dense<0.000000e+00> : vector<8x512xf32>
    %3 = tpu.matmul %1, %2, %cst {dimension_numbers = #tpu.dot_dimension_numbers<[1], [0], [0], [1], [0, 0, 1, 1], [], []>} : vector<8x24xbf16>, vector<24x512xbf16>, vector<8x512xf32> -> vector<8x512xf32>
    %c0_3 = arith.constant 0 : index
    %c0_4 = arith.constant 0 : index
    %4 = vector.load %arg3[%c0_3, %c0_4] : memref<1x512xf32, #tpu.memory_space<vmem>>, vector<1x512xf32>
    %5 = vector.broadcast %4 : vector<1x512xf32> to vector<8x512xf32>
    %6 = arith.addf %3, %5 : vector<8x512xf32>
    %cst_5 = arith.constant 2.000000e-01 : f32
    %7 = vector.broadcast %cst_5 : f32 to vector<8x512xf32>
    %8 = arith.mulf %7, %6 : vector<8x512xf32>
    %9 = arith.maximumf %6, %8 : vector<8x512xf32>
    %10 = arith.truncf %9 : vector<8x512xf32> to vector<8x512xbf16>
    %c0_6 = arith.constant 0 : index
    %c0_7 = arith.constant 0 : index
    %11 = vector.load %arg4[%c0_6, %c0_7] : memref<512x256xbf16, #tpu.memory_space<vmem>>, vector<512x256xbf16>
    %cst_8 = arith.constant dense<0.000000e+00> : vector<8x256xf32>
    %12 = tpu.matmul %10, %11, %cst_8 {dimension_numbers = #tpu.dot_dimension_numbers<[1], [0], [0], [1], [0, 0, 1, 1], [], []>} : vector<8x512xbf16>, vector<512x256xbf16>, vector<8x256xf32> -> vector<8x256xf32>
    %c0_9 = arith.constant 0 : index
    %c0_10 = arith.constant 0 : index
    %13 = vector.load %arg5[%c0_9, %c0_10] : memref<1x256xf32, #tpu.memory_space<vmem>>, vector<1x256xf32>
    %14 = vector.broadcast %13 : vector<1x256xf32> to vector<8x256xf32>
    %15 = arith.addf %12, %14 : vector<8x256xf32>
    %cst_11 = arith.constant 2.000000e-01 : f32
    %16 = vector.broadcast %cst_11 : f32 to vector<8x256xf32>
    %17 = arith.mulf %16, %15 : vector<8x256xf32>
    %18 = arith.maximumf %15, %17 : vector<8x256xf32>
    %c0_12 = arith.constant 0 : index
    %c0_13 = arith.constant 0 : index
    %19 = vector.load %arg6[%c0_12, %c0_13] : memref<1x256xf32, #tpu.memory_space<vmem>>, vector<1x256xf32>
    %20 = vector.broadcast %19 : vector<1x256xf32> to vector<8x256xf32>
    %21 = arith.mulf %18, %20 : vector<8x256xf32>
    %cst_14 = arith.constant dense<0.000000e+00> : vector<8xf32>
    %22 = vector.multi_reduction <add>, %21, %cst_14 [1] : vector<8x256xf32> to vector<8xf32>
    %23 = vector.shape_cast %22 : vector<8xf32> to vector<8x1xf32>
    %c0_15 = arith.constant 0 : index
    %c0_16 = arith.constant 0 : index
    %24 = vector.load %arg7[%c0_15, %c0_16] : memref<1x1xf32, #tpu.memory_space<vmem>>, vector<1x1xf32>
    %25 = vector.broadcast %24 : vector<1x1xf32> to vector<8x1xf32>
    %26 = arith.addf %23, %25 : vector<8x1xf32>
    %cst_17 = arith.constant 0.000000e+00 : f32
    %27 = vector.broadcast %cst_17 : f32 to vector<8x1xf32>
    %28 = arith.subf %27, %26 : vector<8x1xf32>
    %29 = math.exp %28 : vector<8x1xf32>
    %cst_18 = arith.constant 1.000000e+00 : f32
    %30 = vector.broadcast %cst_18 : f32 to vector<8x1xf32>
    %31 = arith.addf %30, %29 : vector<8x1xf32>
    %32 = tpu.reciprocal %31 : vector<8x1xf32> -> vector<8x1xf32>
    %c0_19 = arith.constant 0 : index
    %c0_20 = arith.constant 0 : index
    %33 = vector.load %arg8[%c0_19, %c0_20] : memref<8x1xf32, #tpu.memory_space<vmem>>, vector<8x1xf32>
    tpu.vector_store %arg8[%c0_19, %c0_20], %32 {strides = array<i32>} : memref<8x1xf32, #tpu.memory_space<vmem>>, vector<8x1xf32>,
    return
  }
  func.func @transform_0(%arg0: i32) -> (i32, i32) {
    %c0_i32 = arith.constant 0 : i32
    %c0_i32_0 = arith.constant 0 : i32
    return %arg0, %c0_i32 : i32, i32
  }
  func.func @transform_1(%arg0: i32) -> (i32, i32) {
    %c0_i32 = arith.constant 0 : i32
    %c0_i32_0 = arith.constant 0 : i32
    %c0_i32_1 = arith.constant 0 : i32
    return %c0_i32, %c0_i32_0 : i32, i32
  }
  func.func @transform_2(%arg0: i32) -> (i32, i32) {
    %c0_i32 = arith.constant 0 : i32
    %c0_i32_0 = arith.constant 0 : i32
    %c0_i32_1 = arith.constant 0 : i32
    return %c0_i32, %c0_i32_0 : i32, i32
  }
  func.func @transform_3(%arg0: i32) -> (i32, i32) {
    %c0_i32 = arith.constant 0 : i32
    %c0_i32_0 = arith.constant 0 : i32
    %c0_i32_1 = arith.constant 0 : i32
    return %c0_i32, %c0_i32_0 : i32, i32
  }
  func.func @transform_4(%arg0: i32) -> (i32, i32) {
    %c0_i32 = arith.constant 0 : i32
    %c0_i32_0 = arith.constant 0 : i32
    %c0_i32_1 = arith.constant 0 : i32
    return %c0_i32, %c0_i32_0 : i32, i32
  }
  func.func @transform_5(%arg0: i32) -> (i32, i32) {
    %c0_i32 = arith.constant 0 : i32
    %c0_i32_0 = arith.constant 0 : i32
    %c0_i32_1 = arith.constant 0 : i32
    return %c0_i32, %c0_i32_0 : i32, i32
  }
  func.func @transform_6(%arg0: i32) -> (i32, i32) {
    %c0_i32 = arith.constant 0 : i32
    %c0_i32_0 = arith.constant 0 : i32
    %c0_i32_1 = arith.constant 0 : i32
    return %c0_i32, %c0_i32_0 : i32, i32
  }
  func.func @transform_7(%arg0: i32) -> (i32, i32) {
    %c0_i32 = arith.constant 0 : i32
    %c0_i32_0 = arith.constant 0 : i32
    return %arg0, %c0_i32 : i32, i32
  }
}

</mosaic_0001>

<llo_original>
// kernel: tpu_custom_call.1
$region0: #{tpu_custom_call.1}
  #allocation0 [shape = 'u32[]', space=smem, size = 0x4, offset = 0x4, fixed_abs, tag = 'smem constant byte address 0x4 - core index']
  #allocation1 [shape = 'u32[144,128]{1,0:T(1,128)}', space=vmem, size = 0x12000, scoped, tag = 'internal scratch']
  #allocation2 [shape = 'f32[1,1]{1,0:T(1,128)S(1)}', space=vmem, size = 0x200, scoped, tag = 'scoped memory for tpu_custom_call.1']
  %s0 = inlined_call_operand.hbm [shape: f32[8,24], index: 0, kind: input, shape index: {}]
  %s1 = inlined_call_operand.hbm [shape: bf16[24,512], index: 1, kind: input, shape index: {}]
  %s2 = inlined_call_operand.vmem [shape: f32[1,512], index: 2, kind: input, shape index: {}]
  %s3 = inlined_call_operand.hbm [shape: bf16[512,256], index: 3, kind: input, shape index: {}]
  %s4 = inlined_call_operand.vmem [shape: f32[1,256], index: 4, kind: input, shape index: {}]
  %s5 = inlined_call_operand.vmem [shape: f32[1,256], index: 5, kind: input, shape index: {}]
  %s6 = inlined_call_operand.<no memory space> [shape: f32[1,1], index: 6, kind: input, shape index: {}]
  %s7 = inlined_call_operand.vmem [shape: f32[8,1], index: 7, kind: output, shape index: {}]
  %s8 = sld [smem:[#allocation0]]
  $region50: #{tpu_custom_call.1} parent=0
    _
  %s10 = ssub.s32 1, %s8
  %s11 = scalar_select 0, %s10, %s8
  %v12 = vstv %s6
  %13 = vst [vmem:[#allocation2] sm:$0x1] %v12
  $region1: #{tpu_custom_call.1} parent=0
    #allocation3 [shape = 'u8[4096]{0}', space=vmem, size = 0x1000, scoped, tag = 'input window, operand 0, single buffered']
    #allocation4 [shape = 's32[1]{0}', space=sflag, size = 0x4, scoped, tag = 'scoped memory for tpu_custom_call.1']
    #allocation5 [shape = 'u8[24576]{0}', space=vmem, size = 0x6000, scoped, tag = 'input window, operand 1, single buffered']
    #allocation6 [shape = 's32[1]{0}', space=sflag, size = 0x4, scoped, tag = 'scoped memory for tpu_custom_call.1']
    #allocation7 [shape = 'u8[262144]{0}', space=vmem, size = 0x40000, scoped, tag = 'input window, operand 3, single buffered']
    %14 = vsyncpa [#allocation4], 0
    %15 = vsyncpa [#allocation6], 0
    // Predicated region
    $region2: #{tpu_custom_call.1} parent=1 // pred_check
      _
    $region3: #{tpu_custom_call.1} parent=1 // pred_check_branch
      %17 = sbr.rel (0) target = $region5
    $region4: #{tpu_custom_call.1} parent=1 // pred_region
      %s19 = ssub.s32 128, 128
      %20 = vsyncadd [#allocation4], %s19
      %s22 = sshll.u32 [#allocation3], 4
      %s23 = int_to_ptr.vmem [resolvable:$true] %s22
      %25 = dma.hbm_to_vmem [thread:$0]  %s0, 128, %s23, [#allocation4]
    $region5: #{tpu_custom_call.1} parent=1 // pred_fallthru
      _
    // Predicated region
    $region6: #{tpu_custom_call.1} parent=1 // pred_check
      _
    $region7: #{tpu_custom_call.1} parent=1 // pred_check_branch
      %27 = sbr.rel (0) target = $region9
    $region8: #{tpu_custom_call.1} parent=1 // pred_region
      %s29 = ssub.s32 768, 768
      %30 = vsyncadd [#allocation6], %s29
      %s31 = sshll.u32 [#allocation5], 4
      %s32 = int_to_ptr.vmem [resolvable:$true] %s31
      %37 = dma.hbm_to_vmem [thread:$0]  %s1, 768, %s32, [#allocation6], 256, 256, 16
    $region9: #{tpu_custom_call.1} parent=1 // pred_fallthru
      _
    // Predicated region
    $region10: #{tpu_custom_call.1} parent=1 // pred_check
      _
    $region11: #{tpu_custom_call.1} parent=1 // pred_check_branch
      %39 = sbr.rel (0) target = $region13
    $region12: #{tpu_custom_call.1} parent=1 // pred_region
      _
    $region13: #{tpu_custom_call.1} parent=1 // pred_fallthru
      _
    // Predicated region
    $region14: #{tpu_custom_call.1} parent=1 // pred_check
      _
    $region15: #{tpu_custom_call.1} parent=1 // pred_check_branch
      %41 = sbr.rel (0) target = $region17
    $region16: #{tpu_custom_call.1} parent=1 // pred_region
      %s43 = ssub.s32 8192, 8192
      %44 = vsyncadd [#allocation6], %s43
      %s45 = sshll.u32 [#allocation7], 4
      %s46 = int_to_ptr.vmem [resolvable:$true] %s45
      %51 = dma.hbm_to_vmem [thread:$0]  %s3, 8192, %s46, [#allocation6], 128, 128, 8
    $region17: #{tpu_custom_call.1} parent=1 // pred_fallthru
      _
    // Predicated region
    $region18: #{tpu_custom_call.1} parent=1 // pred_check
      _
    $region19: #{tpu_custom_call.1} parent=1 // pred_check_branch
      %53 = sbr.rel (0) target = $region21
    $region20: #{tpu_custom_call.1} parent=1 // pred_region
      _
    $region21: #{tpu_custom_call.1} parent=1 // pred_fallthru
      _
    // Predicated region
    $region22: #{tpu_custom_call.1} parent=1 // pred_check
      _
    $region23: #{tpu_custom_call.1} parent=1 // pred_check_branch
      %55 = sbr.rel (0) target = $region25
    $region24: #{tpu_custom_call.1} parent=1 // pred_region
      _
    $region25: #{tpu_custom_call.1} parent=1 // pred_fallthru
      _
    // Predicated region
    $region26: #{tpu_custom_call.1} parent=1 // pred_check
      _
    $region27: #{tpu_custom_call.1} parent=1 // pred_check_branch
      %57 = sbr.rel (0) target = $region29
    $region28: #{tpu_custom_call.1} parent=1 // pred_region
      _
    $region29: #{tpu_custom_call.1} parent=1 // pred_fallthru
      _
    // Predicated region
    $region30: #{tpu_custom_call.1} parent=1 // pred_check
      _
    $region31: #{tpu_custom_call.1} parent=1 // pred_check_branch
      %59 = sbr.rel (0) target = $region33
    $region32: #{tpu_custom_call.1} parent=1 // pred_region
      %60 = dma.done [#allocation4], 128
    $region33: #{tpu_custom_call.1} parent=1 // pred_fallthru
      _
    // Predicated region
    $region34: #{tpu_custom_call.1} parent=1 // pred_check
      _
    $region35: #{tpu_custom_call.1} parent=1 // pred_check_branch
      %62 = sbr.rel (0) target = $region37
    $region36: #{tpu_custom_call.1} parent=1 // pred_region
      %63 = dma.done [#allocation6], 768
    $region37: #{tpu_custom_call.1} parent=1 // pred_fallthru
      _
    // Predicated region
    $region38: #{tpu_custom_call.1} parent=1 // pred_check
      _
    $region39: #{tpu_custom_call.1} parent=1 // pred_check_branch
      %65 = sbr.rel (0) target = $region41
    $region40: #{tpu_custom_call.1} parent=1 // pred_region
      %66 = dma.done [#allocation6], 8192
    $region41: #{tpu_custom_call.1} parent=1 // pred_fallthru
      _
    %v68 = vld [vmem:[#allocation3] sm:$0xff]
    %v69 = vpack.c.bf16 %v68, %v68
    %v70 = vld [vmem:[#allocation5] sm:$0xff]
    %v71 = vld [vmem:[#allocation5 + $0x8] sm:$0xff]
    %v72 = vld [vmem:[#allocation5 + $0x10] sm:$0xff]
    %v73 = vld [vmem:[#allocation5 + $0x18] sm:$0xff]
    %v74 = vld [vmem:[#allocation5 + $0x20] sm:$0xff]
    %v75 = vld [vmem:[#allocation5 + $0x28] sm:$0xff]
    %v76 = vld [vmem:[%s2] sm:$0xf]
    %v78 = vlaneseq
    %v79 = vshrl.u32 %v78, 7
    %v80 = vsub.s32 0, %v79
    %v81 = vrot.slane %v76, %v80
    %v82 = vlaneseq
    %v83 = vshrl.u32 %v82, 7
    %v84 = vsub.s32 1, %v83
    %v85 = vrot.slane %v76, %v84
    %v86 = vlaneseq
    %v87 = vshrl.u32 %v86, 7
    %v88 = vsub.s32 2, %v87
    %v89 = vrot.slane %v76, %v88
    %v90 = vlaneseq
    %v91 = vshrl.u32 %v90, 7
    %v92 = vsub.s32 3, %v91
    %v93 = vrot.slane %v76, %v92
    %v104 = vunpack.c.l.b16 %v70
    %v105 = vunpack.c.h.b16 %v70
    %v106 = vunpack.c.l.b16 %v71
    %v107 = vunpack.c.h.b16 %v71
    %v108 = vunpack.c.l.b16 %v72
    %v109 = vunpack.c.h.b16 %v72
    %v110 = vunpack.c.l.b16 %v73
    %v111 = vunpack.c.h.b16 %v73
    %v112 = vunpack.c.l.b16 %v74
    %v113 = vunpack.c.h.b16 %v74
    %v114 = vunpack.c.l.b16 %v75
    %v115 = vunpack.c.h.b16 %v75
    %v116 = vpack.c.b16 %v108, %v104
    %v117 = vpack.c.b16 %v109, %v105
    %v118 = vpack.c.b16 %v110, %v106
    %v119 = vpack.c.b16 %v111, %v107
    %v120 = vpack.c.b16 %v112, %v112
    %v121 = vpack.c.b16 %v113, %v113
    %v122 = vpack.c.b16 %v114, %v114
    %v123 = vpack.c.b16 %v115, %v115
    %vm128 = vcmask 195584
    %v130 = vsel %vm128, %v69, 0
    %vm132 = vcmask 1043456
    %v134 = vsel %vm132, %v120, 0
    %v137 = vsel %vm132, %v121, 0
    %v140 = vsel %vm132, %v122, 0
    %v143 = vsel %vm132, %v123, 0
    %145 = vmatprep.subr.bf16.mxu0 %v117
    %146 = vmatpush1.bf16.msra.mxu0 %v116
    %147 = vmatprep.subr.bf16.mxu0 %v137
    %148 = vmatpush1.bf16.msra.mxu0 %v134
    %149 = vmatprep.subr.bf16.mxu0 0
    %150 = vmatpush1.bf16.msra.mxu0 0
    %151 = vmatprep.subr.bf16.mxu0 0
    %152 = vmatpush1.bf16.msra.mxu0 0
    %153 = vmatprep.subr.bf16.mxu0 0
    %154 = vmatpush1.bf16.msra.mxu0 0
    %155 = vmatprep.subr.bf16.mxu0 0
    %156 = vmatpush1.bf16.msra.mxu0 0
    %157 = vmatprep.subr.bf16.mxu0 0
    %158 = vmatpush1.bf16.msra.mxu0 0
    %159 = vmatprep.subr.bf16.mxu0 0
    %160 = vmatpush1.bf16.msra.mxu0 0
    %161 = vmatprep.subr.bf16.mxu0 0
    %162 = vmatpush1.bf16.msra.mxu0 0
    %163 = vmatprep.subr.bf16.mxu0 0
    %164 = vmatpush1.bf16.msra.mxu0 0
    %165 = vmatprep.subr.bf16.mxu0 0
    %166 = vmatpush1.bf16.msra.mxu0 0
    %167 = vmatprep.subr.bf16.mxu0 0
    %168 = vmatpush1.bf16.msra.mxu0 0
    %169 = vmatprep.subr.bf16.mxu0 0
    %170 = vmatpush1.bf16.msra.mxu0 0
    %171 = vmatprep.subr.bf16.mxu0 0
    %172 = vmatpush1.bf16.msra.mxu0 0
    %173 = vmatprep.subr.bf16.mxu0 0
    %174 = vmatpush1.bf16.msra.mxu0 0
    %175 = vmatprep.subr.bf16.mxu0 0
    %176 = vmatpush1.bf16.msra.mxu0 0
    %177 = vmatprep.mubr.bf16.mxu0 0
    %178 = vmatmul.mubr.bf16.gmra.mrb[0].mxu0 %v130
    %v179 = vpop.f32.mrb[0].mxu0
    %v180 = vadd.f32 %v81, %v179
    %v181 = vpop.f32.mrb[0].mxu0
    %v182 = vadd.f32 %v85, %v181
    %v183 = vpop.f32.mrb[0].mxu0
    %v184 = vpop.f32.mrb[0].mxu0
    %185 = vdwg.mxu0
    %186 = vmatprep.subr.bf16.mxu0 %v119
    %187 = vmatpush1.bf16.msra.mxu0 %v118
    %188 = vmatprep.subr.bf16.mxu0 %v143
    %189 = vmatpush1.bf16.msra.mxu0 %v140
    %190 = vmatprep.subr.bf16.mxu0 0
    %191 = vmatpush1.bf16.msra.mxu0 0
    %192 = vmatprep.subr.bf16.mxu0 0
    %193 = vmatpush1.bf16.msra.mxu0 0
    %194 = vmatprep.subr.bf16.mxu0 0
    %195 = vmatpush1.bf16.msra.mxu0 0
    %196 = vmatprep.subr.bf16.mxu0 0
    %197 = vmatpush1.bf16.msra.mxu0 0
    %198 = vmatprep.subr.bf16.mxu0 0
    %199 = vmatpush1.bf16.msra.mxu0 0
    %200 = vmatprep.subr.bf16.mxu0 0
    %201 = vmatpush1.bf16.msra.mxu0 0
    %202 = vmatprep.subr.bf16.mxu0 0
    %203 = vmatpush1.bf16.msra.mxu0 0
    %204 = vmatprep.subr.bf16.mxu0 0
    %205 = vmatpush1.bf16.msra.mxu0 0
    %206 = vmatprep.subr.bf16.mxu0 0
    %207 = vmatpush1.bf16.msra.mxu0 0
    %208 = vmatprep.subr.bf16.mxu0 0
    %209 = vmatpush1.bf16.msra.mxu0 0
    %210 = vmatprep.subr.bf16.mxu0 0
    %211 = vmatpush1.bf16.msra.mxu0 0
    %212 = vmatprep.subr.bf16.mxu0 0
    %213 = vmatpush1.bf16.msra.mxu0 0
    %214 = vmatprep.subr.bf16.mxu0 0
    %215 = vmatpush1.bf16.msra.mxu0 0
    %216 = vmatprep.subr.bf16.mxu0 0
    %217 = vmatpush1.bf16.msra.mxu0 0
    %218 = vmatprep.mubr.bf16.mxu0 0
    %219 = vmatmul.mubr.bf16.gmra.mrb[0].mxu0 %v130
    %v220 = vpop.f32.mrb[0].mxu0
    %v221 = vadd.f32 %v89, %v220
    %v222 = vpop.f32.mrb[0].mxu0
    %v223 = vadd.f32 %v93, %v222
    %v224 = vpop.f32.mrb[0].mxu0
    %v225 = vpop.f32.mrb[0].mxu0
    %226 = vdwg.mxu0
    %v227 = vmul.f32 %v180, 0.2
    %v228 = vmul.f32 %v182, 0.2
    %v229 = vmul.f32 %v221, 0.2
    %v230 = vmul.f32 %v223, 0.2
    %v231 = vmax.f32 %v180, %v227
    %v232 = vmax.f32 %v182, %v228
    %v233 = vmax.f32 %v221, %v229
    %v234 = vmax.f32 %v223, %v230
    %v235 = vpack.c.bf16 %v231, %v231
    %v236 = vpack.c.bf16 %v232, %v232
    %v237 = vpack.c.bf16 %v233, %v233
    %v238 = vpack.c.bf16 %v234, %v234
    %v239 = vld [vmem:[#allocation7] sm:$0xff]
    %v240 = vld [vmem:[#allocation7 + $0x8] sm:$0xff]
    %v241 = vld [vmem:[#allocation7 + $0x10] sm:$0xff]
    %v242 = vld [vmem:[#allocation7 + $0x18] sm:$0xff]
    %v243 = vld [vmem:[#allocation7 + $0x20] sm:$0xff]
    %v244 = vld [vmem:[#allocation7 + $0x28] sm:$0xff]
    %v245 = vld [vmem:[#allocation7 + $0x30] sm:$0xff]
    %v246 = vld [vmem:[#allocation7 + $0x38] sm:$0xff]
    %v247 = vld [vmem:[#allocation7 + $0x40] sm:$0xff]
    %v248 = vld [vmem:[#allocation7 + $0x48] sm:$0xff]
    %v249 = vld [vmem:[#allocation7 + $0x50] sm:$0xff]
    %v250 = vld [vmem:[#allocation7 + $0x58] sm:$0xff]
    %v251 = vld [vmem:[#allocation7 + $0x60] sm:$0xff]
    %v252 = vld [vmem:[#allocation7 + $0x68] sm:$0xff]
    %v253 = vld [vmem:[#allocation7 + $0x70] sm:$0xff]
    %v254 = vld [vmem:[#allocation7 + $0x78] sm:$0xff]
    %v255 = vld [vmem:[#allocation7 + $0x80] sm:$0xff]
    %v256 = vld [vmem:[#allocation7 + $0x88] sm:$0xff]
    %v257 = vld [vmem:[#allocation7 + $0x90] sm:$0xff]
    %v258 = vld [vmem:[#allocation7 + $0x98] sm:$0xff]
    %v259 = vld [vmem:[#allocation7 + $0xa0] sm:$0xff]
    %v260 = vld [vmem:[#allocation7 + $0xa8] sm:$0xff]
    %v261 = vld [vmem:[#allocation7 + $0xb0] sm:$0xff]
    %v262 = vld [vmem:[#allocation7 + $0xb8] sm:$0xff]
    %v263 = vld [vmem:[#allocation7 + $0xc0] sm:$0xff]
    %v264 = vld [vmem:[#allocation7 + $0xc8] sm:$0xff]
    %v265 = vld [vmem:[#allocation7 + $0xd0] sm:$0xff]
    %v266 = vld [vmem:[#allocation7 + $0xd8] sm:$0xff]
    %v267 = vld [vmem:[#allocation7 + $0xe0] sm:$0xff]
    %v268 = vld [vmem:[#allocation7 + $0xe8] sm:$0xff]
    %v269 = vld [vmem:[#allocation7 + $0xf0] sm:$0xff]
    %v270 = vld [vmem:[#allocation7 + $0xf8] sm:$0xff]
    %v271 = vld [vmem:[#allocation7 + $0x100] sm:$0xff]
    %v272 = vld [vmem:[#allocation7 + $0x108] sm:$0xff]
    %v273 = vld [vmem:[#allocation7 + $0x110] sm:$0xff]
    %v274 = vld [vmem:[#allocation7 + $0x118] sm:$0xff]
    %v275 = vld [vmem:[#allocation7 + $0x120] sm:$0xff]
    %v276 = vld [vmem:[#allocation7 + $0x128] sm:$0xff]
    %v277 = vld [vmem:[#allocation7 + $0x130] sm:$0xff]
    %v278 = vld [vmem:[#allocation7 + $0x138] sm:$0xff]
    %v279 = vld [vmem:[#allocation7 + $0x140] sm:$0xff]
    %v280 = vld [vmem:[#allocation7 + $0x148] sm:$0xff]
    %v281 = vld [vmem:[#allocation7 + $0x150] sm:$0xff]
    %v282 = vld [vmem:[#allocation7 + $0x158] sm:$0xff]
    %v283 = vld [vmem:[#allocation7 + $0x160] sm:$0xff]
    %v284 = vld [vmem:[#allocation7 + $0x168] sm:$0xff]
    %v285 = vld [vmem:[#allocation7 + $0x170] sm:$0xff]
    %v286 = vld [vmem:[#allocation7 + $0x178] sm:$0xff]
    %v287 = vld [vmem:[#allocation7 + $0x180] sm:$0xff]
    %v288 = vld [vmem:[#allocation7 + $0x188] sm:$0xff]
    %v289 = vld [vmem:[#allocation7 + $0x190] sm:$0xff]
    %v290 = vld [vmem:[#allocation7 + $0x198] sm:$0xff]
    %v291 = vld [vmem:[#allocation7 + $0x1a0] sm:$0xff]
    %v292 = vld [vmem:[#allocation7 + $0x1a8] sm:$0xff]
    %v293 = vld [vmem:[#allocation7 + $0x1b0] sm:$0xff]
    %v294 = vld [vmem:[#allocation7 + $0x1b8] sm:$0xff]
    %v295 = vld [vmem:[#allocation7 + $0x1c0] sm:$0xff]
    %v296 = vld [vmem:[#allocation7 + $0x1c8] sm:$0xff]
    %v297 = vld [vmem:[#allocation7 + $0x1d0] sm:$0xff]
    %v298 = vld [vmem:[#allocation7 + $0x1d8] sm:$0xff]
    %v299 = vld [vmem:[#allocation7 + $0x1e0] sm:$0xff]
    %v300 = vld [vmem:[#allocation7 + $0x1e8] sm:$0xff]
    %v301 = vld [vmem:[#allocation7 + $0x1f0] sm:$0xff]
    %v302 = vld [vmem:[#allocation7 + $0x1f8] sm:$0xff]
    %v303 = vld [vmem:[%s4] sm:$0x3]
    %v305 = vlaneseq
    %v306 = vshrl.u32 %v305, 7
    %v307 = vsub.s32 0, %v306
    %v308 = vrot.slane %v303, %v307
    %v309 = vlaneseq
    %v310 = vshrl.u32 %v309, 7
    %v311 = vsub.s32 1, %v310
    %v312 = vrot.slane %v303, %v311
    %v379 = vunpack.c.l.b16 %v239
    %v380 = vunpack.c.h.b16 %v239
    %v381 = vunpack.c.l.b16 %v240
    %v382 = vunpack.c.h.b16 %v240
    %v383 = vunpack.c.l.b16 %v241
    %v384 = vunpack.c.h.b16 %v241
    %v385 = vunpack.c.l.b16 %v242
    %v386 = vunpack.c.h.b16 %v242
    %v387 = vunpack.c.l.b16 %v243
    %v388 = vunpack.c.h.b16 %v243
    %v389 = vunpack.c.l.b16 %v244
    %v390 = vunpack.c.h.b16 %v244
    %v391 = vunpack.c.l.b16 %v245
    %v392 = vunpack.c.h.b16 %v245
    %v393 = vunpack.c.l.b16 %v246
    %v394 = vunpack.c.h.b16 %v246
    %v395 = vunpack.c.l.b16 %v247
    %v396 = vunpack.c.h.b16 %v247
    %v397 = vunpack.c.l.b16 %v248
    %v398 = vunpack.c.h.b16 %v248
    %v399 = vunpack.c.l.b16 %v249
    %v400 = vunpack.c.h.b16 %v249
    %v401 = vunpack.c.l.b16 %v250
    %v402 = vunpack.c.h.b16 %v250
    %v403 = vunpack.c.l.b16 %v251
    %v404 = vunpack.c.h.b16 %v251
    %v405 = vunpack.c.l.b16 %v252
    %v406 = vunpack.c.h.b16 %v252
    %v407 = vunpack.c.l.b16 %v253
    %v408 = vunpack.c.h.b16 %v253
    %v409 = vunpack.c.l.b16 %v254
    %v410 = vunpack.c.h.b16 %v254
    %v411 = vunpack.c.l.b16 %v255
    %v412 = vunpack.c.h.b16 %v255
    %v413 = vunpack.c.l.b16 %v256
    %v414 = vunpack.c.h.b16 %v256
    %v415 = vunpack.c.l.b16 %v257
    %v416 = vunpack.c.h.b16 %v257
    %v417 = vunpack.c.l.b16 %v258
    %v418 = vunpack.c.h.b16 %v258
    %v419 = vunpack.c.l.b16 %v259
    %v420 = vunpack.c.h.b16 %v259
    %v421 = vunpack.c.l.b16 %v260
    %v422 = vunpack.c.h.b16 %v260
    %v423 = vunpack.c.l.b16 %v261
    %v424 = vunpack.c.h.b16 %v261
    %v425 = vunpack.c.l.b16 %v262
    %v426 = vunpack.c.h.b16 %v262
    %v427 = vunpack.c.l.b16 %v263
    %v428 = vunpack.c.h.b16 %v263
    %v429 = vunpack.c.l.b16 %v264
    %v430 = vunpack.c.h.b16 %v264
    %v431 = vunpack.c.l.b16 %v265
    %v432 = vunpack.c.h.b16 %v265
    %v433 = vunpack.c.l.b16 %v266
    %v434 = vunpack.c.h.b16 %v266
    %v435 = vunpack.c.l.b16 %v267
    %v436 = vunpack.c.h.b16 %v267
    %v437 = vunpack.c.l.b16 %v268
    %v438 = vunpack.c.h.b16 %v268
    %v439 = vunpack.c.l.b16 %v269
    %v440 = vunpack.c.h.b16 %v269
    %v441 = vunpack.c.l.b16 %v270
    %v442 = vunpack.c.h.b16 %v270
    %v443 = vunpack.c.l.b16 %v271
    %v444 = vunpack.c.h.b16 %v271
    %v445 = vunpack.c.l.b16 %v272
    %v446 = vunpack.c.h.b16 %v272
    %v447 = vunpack.c.l.b16 %v273
    %v448 = vunpack.c.h.b16 %v273
    %v449 = vunpack.c.l.b16 %v274
    %v450 = vunpack.c.h.b16 %v274
    %v451 = vunpack.c.l.b16 %v275
    %v452 = vunpack.c.h.b16 %v275
    %v453 = vunpack.c.l.b16 %v276
    %v454 = vunpack.c.h.b16 %v276
    %v455 = vunpack.c.l.b16 %v277
    %v456 = vunpack.c.h.b16 %v277
    %v457 = vunpack.c.l.b16 %v278
    %v458 = vunpack.c.h.b16 %v278
    %v459 = vunpack.c.l.b16 %v279
    %v460 = vunpack.c.h.b16 %v279
    %v461 = vunpack.c.l.b16 %v280
    %v462 = vunpack.c.h.b16 %v280
    %v463 = vunpack.c.l.b16 %v281
    %v464 = vunpack.c.h.b16 %v281
    %v465 = vunpack.c.l.b16 %v282
    %v466 = vunpack.c.h.b16 %v282
    %v467 = vunpack.c.l.b16 %v283
    %v468 = vunpack.c.h.b16 %v283
    %v469 = vunpack.c.l.b16 %v284
    %v470 = vunpack.c.h.b16 %v284
    %v471 = vunpack.c.l.b16 %v285
    %v472 = vunpack.c.h.b16 %v285
    %v473 = vunpack.c.l.b16 %v286
    %v474 = vunpack.c.h.b16 %v286
    %v475 = vunpack.c.l.b16 %v287
    %v476 = vunpack.c.h.b16 %v287
    %v477 = vunpack.c.l.b16 %v288
    %v478 = vunpack.c.h.b16 %v288
    %v479 = vunpack.c.l.b16 %v289
    %v480 = vunpack.c.h.b16 %v289
    %v481 = vunpack.c.l.b16 %v290
    %v482 = vunpack.c.h.b16 %v290
    %v483 = vunpack.c.l.b16 %v291
    %v484 = vunpack.c.h.b16 %v291
    %v485 = vunpack.c.l.b16 %v292
    %v486 = vunpack.c.h.b16 %v292
    %v487 = vunpack.c.l.b16 %v293
    %v488 = vunpack.c.h.b16 %v293
    %v489 = vunpack.c.l.b16 %v294
    %v490 = vunpack.c.h.b16 %v294
    %v491 = vunpack.c.l.b16 %v295
    %v492 = vunpack.c.h.b16 %v295
    %v493 = vunpack.c.l.b16 %v296
    %v494 = vunpack.c.h.b16 %v296
    %v495 = vunpack.c.l.b16 %v297
    %v496 = vunpack.c.h.b16 %v297
    %v497 = vunpack.c.l.b16 %v298
    %v498 = vunpack.c.h.b16 %v298
    %v499 = vunpack.c.l.b16 %v299
    %v500 = vunpack.c.h.b16 %v299
    %v501 = vunpack.c.l.b16 %v300
    %v502 = vunpack.c.h.b16 %v300
    %v503 = vunpack.c.l.b16 %v301
    %v504 = vunpack.c.h.b16 %v301
    %v505 = vunpack.c.l.b16 %v302
    %v506 = vunpack.c.h.b16 %v302
    %v507 = vpack.c.b16 %v381, %v379
    %v508 = vpack.c.b16 %v382, %v380
    %v509 = vpack.c.b16 %v385, %v383
    %v510 = vpack.c.b16 %v386, %v384
    %v511 = vpack.c.b16 %v389, %v387
    %v512 = vpack.c.b16 %v390, %v388
    %v513 = vpack.c.b16 %v393, %v391
    %v514 = vpack.c.b16 %v394, %v392
    %v515 = vpack.c.b16 %v397, %v395
    %v516 = vpack.c.b16 %v398, %v396
    %v517 = vpack.c.b16 %v401, %v399
    %v518 = vpack.c.b16 %v402, %v400
    %v519 = vpack.c.b16 %v405, %v403
    %v520 = vpack.c.b16 %v406, %v404
    %v521 = vpack.c.b16 %v409, %v407
    %v522 = vpack.c.b16 %v410, %v408
    %v523 = vpack.c.b16 %v413, %v411
    %v524 = vpack.c.b16 %v414, %v412
    %v525 = vpack.c.b16 %v417, %v415
    %v526 = vpack.c.b16 %v418, %v416
    %v527 = vpack.c.b16 %v421, %v419
    %v528 = vpack.c.b16 %v422, %v420
    %v529 = vpack.c.b16 %v425, %v423
    %v530 = vpack.c.b16 %v426, %v424
    %v531 = vpack.c.b16 %v429, %v427
    %v532 = vpack.c.b16 %v430, %v428
    %v533 = vpack.c.b16 %v433, %v431
    %v534 = vpack.c.b16 %v434, %v432
    %v535 = vpack.c.b16 %v437, %v435
    %v536 = vpack.c.b16 %v438, %v436
    %v537 = vpack.c.b16 %v441, %v439
    %v538 = vpack.c.b16 %v442, %v440
    %v539 = vpack.c.b16 %v445, %v443
    %v540 = vpack.c.b16 %v446, %v444
    %v541 = vpack.c.b16 %v449, %v447
    %v542 = vpack.c.b16 %v450, %v448
    %v543 = vpack.c.b16 %v453, %v451
    %v544 = vpack.c.b16 %v454, %v452
    %v545 = vpack.c.b16 %v457, %v455
    %v546 = vpack.c.b16 %v458, %v456
    %v547 = vpack.c.b16 %v461, %v459
    %v548 = vpack.c.b16 %v462, %v460
    %v549 = vpack.c.b16 %v465, %v463
    %v550 = vpack.c.b16 %v466, %v464
    %v551 = vpack.c.b16 %v469, %v467
    %v552 = vpack.c.b16 %v470, %v468
    %v553 = vpack.c.b16 %v473, %v471
    %v554 = vpack.c.b16 %v474, %v472
    %v555 = vpack.c.b16 %v477, %v475
    %v556 = vpack.c.b16 %v478, %v476
    %v557 = vpack.c.b16 %v481, %v479
    %v558 = vpack.c.b16 %v482, %v480
    %v559 = vpack.c.b16 %v485, %v483
    %v560 = vpack.c.b16 %v486, %v484
    %v561 = vpack.c.b16 %v489, %v487
    %v562 = vpack.c.b16 %v490, %v488
    %v563 = vpack.c.b16 %v493, %v491
    %v564 = vpack.c.b16 %v494, %v492
    %v565 = vpack.c.b16 %v497, %v495
    %v566 = vpack.c.b16 %v498, %v496
    %v567 = vpack.c.b16 %v501, %v499
    %v568 = vpack.c.b16 %v502, %v500
    %v569 = vpack.c.b16 %v505, %v503
    %v570 = vpack.c.b16 %v506, %v504
    %635 = vmatprep.subr.bf16.mxu0 %v508
    %636 = vmatpush1.bf16.msra.mxu0 %v507
    %637 = vmatprep.subr.bf16.mxu0 %v510
    %638 = vmatpush1.bf16.msra.mxu0 %v509
    %639 = vmatprep.subr.bf16.mxu0 %v512
    %640 = vmatpush1.bf16.msra.mxu0 %v511
    %641 = vmatprep.subr.bf16.mxu0 %v514
    %642 = vmatpush1.bf16.msra.mxu0 %v513
    %643 = vmatprep.subr.bf16.mxu0 %v516
    %644 = vmatpush1.bf16.msra.mxu0 %v515
    %645 = vmatprep.subr.bf16.mxu0 %v518
    %646 = vmatpush1.bf16.msra.mxu0 %v517
    %647 = vmatprep.subr.bf16.mxu0 %v520
    %648 = vmatpush1.bf16.msra.mxu0 %v519
    %649 = vmatprep.subr.bf16.mxu0 %v522
    %650 = vmatpush1.bf16.msra.mxu0 %v521
    %651 = vmatprep.subr.bf16.mxu0 %v524
    %652 = vmatpush1.bf16.msra.mxu0 %v523
    %653 = vmatprep.subr.bf16.mxu0 %v526
    %654 = vmatpush1.bf16.msra.mxu0 %v525
    %655 = vmatprep.subr.bf16.mxu0 %v528
    %656 = vmatpush1.bf16.msra.mxu0 %v527
    %657 = vmatprep.subr.bf16.mxu0 %v530
    %658 = vmatpush1.bf16.msra.mxu0 %v529
    %659 = vmatprep.subr.bf16.mxu0 %v532
    %660 = vmatpush1.bf16.msra.mxu0 %v531
    %661 = vmatprep.subr.bf16.mxu0 %v534
    %662 = vmatpush1.bf16.msra.mxu0 %v533
    %663 = vmatprep.subr.bf16.mxu0 %v536
    %664 = vmatpush1.bf16.msra.mxu0 %v535
    %665 = vmatprep.subr.bf16.mxu0 %v538
    %666 = vmatpush1.bf16.msra.mxu0 %v537
    %667 = vmatprep.mubr.bf16.mxu0 %v236
    %668 = vmatmul.mubr.bf16.gmra.mrb[0].mxu0 %v235
    %v669 = vpop.f32.mrb[0].mxu0
    %v670 = vadd.f32 %v308, %v669
    %v671 = vpop.f32.mrb[0].mxu0
    %v672 = vadd.f32 %v312, %v671
    %v673 = vpop.f32.mrb[0].mxu0
    %v674 = vpop.f32.mrb[0].mxu0
    %675 = vdwg.mxu0
    %676 = vmatprep.subr.bf16.mxu0 %v540
    %677 = vmatpush1.bf16.msra.mxu0 %v539
    %678 = vmatprep.subr.bf16.mxu0 %v542
    %679 = vmatpush1.bf16.msra.mxu0 %v541
    %680 = vmatprep.subr.bf16.mxu0 %v544
    %681 = vmatpush1.bf16.msra.mxu0 %v543
    %682 = vmatprep.subr.bf16.mxu0 %v546
    %683 = vmatpush1.bf16.msra.mxu0 %v545
    %684 = vmatprep.subr.bf16.mxu0 %v548
    %685 = vmatpush1.bf16.msra.mxu0 %v547
    %686 = vmatprep.subr.bf16.mxu0 %v550
    %687 = vmatpush1.bf16.msra.mxu0 %v549
    %688 = vmatprep.subr.bf16.mxu0 %v552
    %689 = vmatpush1.bf16.msra.mxu0 %v551
    %690 = vmatprep.subr.bf16.mxu0 %v554
    %691 = vmatpush1.bf16.msra.mxu0 %v553
    %692 = vmatprep.subr.bf16.mxu0 %v556
    %693 = vmatpush1.bf16.msra.mxu0 %v555
    %694 = vmatprep.subr.bf16.mxu0 %v558
    %695 = vmatpush1.bf16.msra.mxu0 %v557
    %696 = vmatprep.subr.bf16.mxu0 %v560
    %697 = vmatpush1.bf16.msra.mxu0 %v559
    %698 = vmatprep.subr.bf16.mxu0 %v562
    %699 = vmatpush1.bf16.msra.mxu0 %v561
    %700 = vmatprep.subr.bf16.mxu0 %v564
    %701 = vmatpush1.bf16.msra.mxu0 %v563
    %702 = vmatprep.subr.bf16.mxu0 %v566
    %703 = vmatpush1.bf16.msra.mxu0 %v565
    %704 = vmatprep.subr.bf16.mxu0 %v568
    %705 = vmatpush1.bf16.msra.mxu0 %v567
    %706 = vmatprep.subr.bf16.mxu0 %v570
    %707 = vmatpush1.bf16.msra.mxu0 %v569
    %708 = vmatprep.mubr.bf16.mxu0 %v238
    %709 = vmatmul.mubr.bf16.gmra.mrb[0].mxu0 %v237
    %v710 = vpop.f32.mrb[0].mxu0
    %v711 = vadd.f32 %v670, %v710
    %v712 = vpop.f32.mrb[0].mxu0
    %v713 = vadd.f32 %v672, %v712
    %v714 = vpop.f32.mrb[0].mxu0
    %v715 = vpop.f32.mrb[0].mxu0
    %716 = vdwg.mxu0
    %v717 = vmul.f32 %v711, 0.2
    %v718 = vmul.f32 %v713, 0.2
    %v719 = vmax.f32 %v711, %v717
    %v720 = vmax.f32 %v713, %v718
    %v721 = vld [vmem:[%s5] sm:$0x3]
    %v723 = vlaneseq
    %v724 = vshrl.u32 %v723, 7
    %v725 = vsub.s32 0, %v724
    %v726 = vrot.slane %v721, %v725
    %v727 = vlaneseq
    %v728 = vshrl.u32 %v727, 7
    %v729 = vsub.s32 1, %v728
    %v730 = vrot.slane %v721, %v729
    %v733 = vmul.f32 %v719, %v726
    %v734 = vmul.f32 %v720, %v730
    %v735 = vadd.f32 %v733, %v734
    %736 = vadd.xlane.f32.xlu0 %v735
    %v737 = vpop.xlane.xlu0 %736
    %v738 = vld [vmem:[#allocation2] sm:$0x1]
    %v740 = vlaneseq
    %v741 = vshrl.u32 %v740, 7
    %v742 = vsub.s32 0, %v741
    %v743 = vrot.slane %v738, %v742
    %v745 = vadd.f32 %v737, %v743
    %v746 = vsub.f32 0.0, %v745
    %v747 = vmul.f32 %v746, 1.442695
    %v748 = vpow.pop %v747
    %v749 = vadd.f32 %v748, 1.0
    %v750 = vrcp.pop %v749
    %vm751 = vcmask 7168
    %752 = vst.msk [vmem:[%s7] sm:$0xff] %vm751, %v750
    // Predicated region
    $region42: #{tpu_custom_call.1} parent=1 // pred_check
      _
    $region43: #{tpu_custom_call.1} parent=1 // pred_check_branch
      %754 = sbr.rel (0) target = $region45
    $region44: #{tpu_custom_call.1} parent=1 // pred_region
      _
    $region45: #{tpu_custom_call.1} parent=1 // pred_fallthru
      _
    // Predicated region
    $region46: #{tpu_custom_call.1} parent=1 // pred_check
      _
    $region47: #{tpu_custom_call.1} parent=1 // pred_check_branch
      %756 = sbr.rel (0) target = $region49
    $region48: #{tpu_custom_call.1} parent=1 // pred_region
      _
    $region49: #{tpu_custom_call.1} parent=1 // pred_fallthru
      _
    %757 = vsyncpa [#allocation4], 1
    %758 = vsyncpa [#allocation6], 1

</llo_original>
